<compile_context>
chip_gen: v5e
topology: v5e:2x2
jax: 0.10.0
libtpu: 0.0.40
codegen_flags: <defaults>
</compile_context>

<pallas_src>
import functools

import numpy as np
import jax
import jax.numpy as jnp
from jax.experimental import pallas as pl
from jax.experimental.pallas import tpu as pltpu

LANES = 128
SUBLANES = 8


def _masked_edge_attn_kernel(m_ref, w_ref, mask_ref, out_ref, *, s_valid):
    # Per grid step (one batch element b):
    #   m_ref:    (1, D, Sp)   f32   M[:, b, :]^T, seq padded to Sp (multiple of 128)
    #   w_ref:    (Lp, D)      f32   linear weight, max_seq_len padded to multiple of 8
    #   mask_ref: (1, Lp, Sp)  int8  0/1 edge mask
    #   out_ref:  (1, Lp, Sp)  f32   scores
    _, lp, sp = out_ref.shape

    m = m_ref[0]          # (D, Sp)   lane-dense on Sp
    w = w_ref[...]        # (Lp, D)

    # NN MXU contraction: (Lp, D) x (D, Sp) -> (Lp, Sp).  K is minor on the LHS,
    # the lane axis (Sp) is minor on the RHS -> no relayout, lane-dense result.
    scale = jax.lax.dot_general(
        w, m, (((1,), (0,)), ((), ())), preferred_element_type=jnp.float32
    )

    # Seq-padding columns -> -inf BEFORE max/exp so they contribute exactly 0
    # (e = exp(-inf - mx) = 0) and the row max is taken over valid columns only.
    if s_valid < sp:
        valid = jax.lax.broadcasted_iota(jnp.int32, (lp, sp), 1) < s_valid
        scale = jnp.where(valid, scale, -jnp.inf)

    mask_f = mask_ref[0].astype(jnp.float32)  # (Lp, Sp) 0/1

    # Numerically-stable exp.  The softmax denominator Z cancels exactly against the
    # edge re-normalization, so alpha = e/Z is never computed:
    #   scores = (e * mask_eps) / sum(e * mask_eps) * mask_copy
    mx = jnp.max(scale, axis=-1, keepdims=True)         # finite: >=1 valid column
    e = jnp.exp(scale - mx)                              # 0 on pad columns
    mask_eps = jnp.where(mask_f > 0.5, 1.0, 1e-10)
    masked = e * mask_eps
    sums = jnp.sum(masked, axis=-1, keepdims=True)       # >= e(max)=1 * 1e-10 > 0

    # EUP approximate reciprocal + one Newton-Raphson refinement: ~f32-exact,
    # no VALU divide.
    r = pl.reciprocal(sums, approx=True)
    r = r * (2.0 - sums * r)

    out_ref[0] = masked * r * mask_f                     # * mask_copy (single vmul)


def masked_edge_attention(M_sbd, W, mask_bls):
    """M_sbd: (seq, batch, input_dim); W: (max_seq_len, input_dim);
    mask_bls: (batch, max_seq_len, seq) with 1.0 at edge indices, 0.0 elsewhere.
    Returns scores (batch, max_seq_len, seq) float32, matching the PyTorch module."""
    S, B, D = M_sbd.shape
    L = W.shape[0]
    Sp = -(-S // LANES) * LANES       # lane-dense seq axis
    Lp = -(-L // SUBLANES) * SUBLANES  # sublane-aligned max_seq_len axis

    # Host-side layout plumbing (cheap XLA ops, outside the kernel).
    # (S, B, D) -> (B, D, Sp): NN layout, K=D on sublanes, Sp on lanes.
    M_bds = jnp.transpose(M_sbd, (1, 2, 0)).astype(jnp.float32)
    M_p = jnp.pad(M_bds, ((0, 0), (0, 0), (0, Sp - S)))
    W_p = jnp.pad(W.astype(jnp.float32), ((0, Lp - L), (0, 0)))
    mask_p = jnp.pad(mask_bls, ((0, 0), (0, Lp - L), (0, Sp - S))).astype(jnp.int8)

    kernel = functools.partial(_masked_edge_attn_kernel, s_valid=S)
    out = pl.pallas_call(
        kernel,
        out_shape=jax.ShapeDtypeStruct((B, Lp, Sp), jnp.float32),
        grid_spec=pltpu.PrefetchScalarGridSpec(
            num_scalar_prefetch=0,
            grid=(B,),  # one batch element per grid step; double-buffered DMAs
            in_specs=[
                pl.BlockSpec((1, D, Sp), lambda b: (b, 0, 0)),
                pl.BlockSpec((Lp, D), lambda b: (0, 0)),
                pl.BlockSpec((1, Lp, Sp), lambda b: (b, 0, 0)),
            ],
            out_specs=pl.BlockSpec((1, Lp, Sp), lambda b: (b, 0, 0)),
        ),
        compiler_params=pltpu.CompilerParams(
            dimension_semantics=("parallel",)  # independent batches; 2 TCs on v7x
        ),
    )(M_p, W_p, mask_p)
    return out[:, :L, :S]


def build_edge_mask(edge_ind, batch, max_seq_len, seq):
    # Host-side glue: the PyTorch scatter mask[i, x0, x1] = 1 from `edge_ind`.
    mask = np.zeros((batch, max_seq_len, seq), dtype=np.float32)
    for i, edges in enumerate(edge_ind):
        for (x0, x1) in edges:
            mask[i, x0, x1] = 1.0
    return jnp.asarray(mask)


def _reference(M_sbd, W, mask_bls):
    # Pure-JAX mirror of the PyTorch forward (f32 throughout).
    scale = jnp.einsum("sbd,ld->sbl", M_sbd, W)
    alpha = jax.nn.softmax(scale, axis=0).transpose(1, 2, 0)     # (B, L, S)
    mask_eps = jnp.where(mask_bls > 0.5, 1.0, 1e-10)
    masked = alpha * mask_eps
    sums = masked.sum(-1, keepdims=True)
    return masked / sums * mask_bls


if __name__ == "__main__":
    # Small shapes consistent with the module: seq=8, batch=2, input_dim=2*D_e=32,
    # max_seq_len=16.
    seq, batch, input_dim, max_seq_len = 8, 2, 32, 16

    key = jax.random.PRNGKey(0)
    k_m, k_w = jax.random.split(key)
    M_sbd = jax.random.normal(k_m, (seq, batch, input_dim), dtype=jnp.float32)
    W = jax.random.normal(k_w, (max_seq_len, input_dim), dtype=jnp.float32) * 0.1

    edge_ind = [
        [(0, 1), (1, 2), (2, 3), (3, 4), (0, 3)],
        [(0, 2), (2, 5), (5, 7), (1, 1), (4, 6)],
    ]
    mask_bls = build_edge_mask(edge_ind, batch, max_seq_len, seq)

    scores = masked_edge_attention(M_sbd, W, mask_bls)
    scores = jax.block_until_ready(scores)
    assert scores.shape == (batch, max_seq_len, seq)

    ref = _reference(M_sbd, W, mask_bls)
    # approx reciprocal + one NR step is ~f32-exact; remaining deltas are just
    # different f32 summation/cancellation order vs the reference.
    np.testing.assert_allclose(np.asarray(scores), np.asarray(ref), rtol=1e-4, atol=1e-7)

    print("KERNEL_OK")
</pallas_src>

<mosaic_0001>
module attributes {stable_mosaic.version = 11 : i64} {
  func.func @_masked_edge_attn_kernel(%arg0: i32, %arg1: memref<1x32x128xf32, #tpu.memory_space<vmem>>, %arg2: memref<16x32xf32, #tpu.memory_space<vmem>>, %arg3: memref<1x16x128xi8, #tpu.memory_space<vmem>>, %arg4: memref<1x16x128xf32, #tpu.memory_space<vmem>>) attributes {dimension_semantics = [#tpu.dimension_semantics<parallel>], iteration_bounds = array<i64: 2>, scalar_prefetch = 0 : i64, scratch_operands = 0 : i64, tpu.core_type = #tpu.core_type<tc>, window_params = [{transform_indices = @transform_0, window_bounds = array<i64: 1, 32, 128>}, {pipeline_mode = #tpu.pipeline_mode<synchronous>, transform_indices = @transform_1, window_bounds = array<i64: 16, 32>}, {transform_indices = @transform_2, window_bounds = array<i64: 1, 16, 128>}, {transform_indices = @transform_3, window_bounds = array<i64: 1, 16, 128>}]} {
    %c0 = arith.constant 0 : index
    %c0_0 = arith.constant 0 : index
    %c0_1 = arith.constant 0 : index
    %0 = vector.load %arg1[%c0, %c0_0, %c0_1] : memref<1x32x128xf32, #tpu.memory_space<vmem>>, vector<1x32x128xf32>
    %1 = vector.shape_cast %0 : vector<1x32x128xf32> to vector<32x128xf32>
    %c0_2 = arith.constant 0 : index
    %c0_3 = arith.constant 0 : index
    %2 = vector.load %arg2[%c0_2, %c0_3] : memref<16x32xf32, #tpu.memory_space<vmem>>, vector<16x32xf32>
    %cst = arith.constant dense<0.000000e+00> : vector<16x128xf32>
    %3 = tpu.matmul %2, %1, %cst {dimension_numbers = #tpu.dot_dimension_numbers<[1], [0], [0], [1], [0, 0, 1, 1], [], []>} : vector<16x32xf32>, vector<32x128xf32>, vector<16x128xf32> -> vector<16x128xf32>
    %4 = tpu.iota {dimensions = array<i32: 1>} : vector<16x128xi32>
    %c8_i32 = arith.constant 8 : i32
    %5 = vector.broadcast %c8_i32 : i32 to vector<16x128xi32>
    %6 = arith.cmpi slt, %4, %5 : vector<16x128xi32>
    %cst_4 = arith.constant 0xFF800000 : f32
    %7 = vector.broadcast %cst_4 : f32 to vector<16x128xf32>
    %8 = arith.select %6, %3, %7 : vector<16x128xi1>, vector<16x128xf32>
    %c0_5 = arith.constant 0 : index
    %c0_6 = arith.constant 0 : index
    %c0_7 = arith.constant 0 : index
    %9 = vector.load %arg3[%c0_5, %c0_6, %c0_7] : memref<1x16x128xi8, #tpu.memory_space<vmem>>, vector<1x16x128xi8>
    %10 = vector.shape_cast %9 : vector<1x16x128xi8> to vector<16x128xi8>
    %11 = arith.sitofp %10 : vector<16x128xi8> to vector<16x128xf32>
    %cst_8 = arith.constant dense<0xFF800000> : vector<16xf32>
    %12 = vector.multi_reduction <maximumf>, %8, %cst_8 [1] : vector<16x128xf32> to vector<16xf32>
    %13 = vector.shape_cast %12 : vector<16xf32> to vector<16x1xf32>
    %14 = vector.broadcast %13 : vector<16x1xf32> to vector<16x128xf32>
    %15 = arith.subf %8, %14 : vector<16x128xf32>
    %16 = math.exp %15 : vector<16x128xf32>
    %cst_9 = arith.constant 5.000000e-01 : f32
    %17 = vector.broadcast %cst_9 : f32 to vector<16x128xf32>
    %18 = arith.cmpf ogt, %11, %17 : vector<16x128xf32>
    %cst_10 = arith.constant 1.000000e+00 : f32
    %cst_11 = arith.constant 1.000000e-10 : f32
    %19 = vector.broadcast %cst_10 : f32 to vector<16x128xf32>
    %20 = vector.broadcast %cst_11 : f32 to vector<16x128xf32>
    %21 = arith.select %18, %19, %20 : vector<16x128xi1>, vector<16x128xf32>
    %22 = arith.mulf %16, %21 : vector<16x128xf32>
    %cst_12 = arith.constant dense<0.000000e+00> : vector<16xf32>
    %23 = vector.multi_reduction <add>, %22, %cst_12 [1] : vector<16x128xf32> to vector<16xf32>
    %24 = vector.shape_cast %23 : vector<16xf32> to vector<16x1xf32>
    %25 = tpu.reciprocal %24 {approx = true} : vector<16x1xf32> -> vector<16x1xf32>
    %26 = arith.mulf %24, %25 : vector<16x1xf32>
    %cst_13 = arith.constant 2.000000e+00 : f32
    %27 = vector.broadcast %cst_13 : f32 to vector<16x1xf32>
    %28 = arith.subf %27, %26 : vector<16x1xf32>
    %29 = arith.mulf %25, %28 : vector<16x1xf32>
    %30 = vector.broadcast %29 : vector<16x1xf32> to vector<16x128xf32>
    %31 = arith.mulf %22, %30 : vector<16x128xf32>
    %32 = arith.mulf %31, %11 : vector<16x128xf32>
    %c0_14 = arith.constant 0 : index
    %c0_15 = arith.constant 0 : index
    %c0_16 = arith.constant 0 : index
    %33 = vector.load %arg4[%c0_14, %c0_15, %c0_16] : memref<1x16x128xf32, #tpu.memory_space<vmem>>, vector<1x16x128xf32>
    %34 = vector.shape_cast %33 : vector<1x16x128xf32> to vector<16x128xf32>
    %35 = vector.shape_cast %32 : vector<16x128xf32> to vector<1x16x128xf32>
    tpu.vector_store %arg4[%c0_14, %c0_15, %c0_16], %35 {strides = array<i32>} : memref<1x16x128xf32, #tpu.memory_space<vmem>>, vector<1x16x128xf32>,
    return
  }
  func.func @transform_0(%arg0: i32) -> (i32, i32, i32) {
    %c0_i32 = arith.constant 0 : i32
    %c0_i32_0 = arith.constant 0 : i32
    %c0_i32_1 = arith.constant 0 : i32
    return %arg0, %c0_i32, %c0_i32_0 : i32, i32, i32
  }
  func.func @transform_1(%arg0: i32) -> (i32, i32) {
    %c0_i32 = arith.constant 0 : i32
    %c0_i32_0 = arith.constant 0 : i32
    %c0_i32_1 = arith.constant 0 : i32
    return %c0_i32, %c0_i32_0 : i32, i32
  }
  func.func @transform_2(%arg0: i32) -> (i32, i32, i32) {
    %c0_i32 = arith.constant 0 : i32
    %c0_i32_0 = arith.constant 0 : i32
    %c0_i32_1 = arith.constant 0 : i32
    return %arg0, %c0_i32, %c0_i32_0 : i32, i32, i32
  }
  func.func @transform_3(%arg0: i32) -> (i32, i32, i32) {
    %c0_i32 = arith.constant 0 : i32
    %c0_i32_0 = arith.constant 0 : i32
    %c0_i32_1 = arith.constant 0 : i32
    return %arg0, %c0_i32, %c0_i32_0 : i32, i32, i32
  }
}

</mosaic_0001>

<llo_original>
// kernel: tpu_custom_call.1
$region0: #{tpu_custom_call.1}
  #allocation0 [shape = 'u32[]', space=smem, size = 0x4, offset = 0x4, fixed_abs, tag = 'smem constant byte address 0x4 - core index']
  #allocation1 [shape = 'u32[72,128]{1,0:T(1,128)}', space=vmem, size = 0x9000, scoped, tag = 'internal scratch']
  %s0 = inlined_call_operand.hbm [shape: f32[2,32,128], index: 0, kind: input, shape index: {}]
  %s1 = inlined_call_operand.hbm [shape: f32[16,32], index: 1, kind: input, shape index: {}]
  %s2 = inlined_call_operand.hbm [shape: s8[2,16,128], index: 2, kind: input, shape index: {}]
  %s3 = inlined_call_operand.hbm [shape: f32[2,16,128], index: 3, kind: output, shape index: {}]
  %s4 = sld [smem:[#allocation0]]
  $region57: #{tpu_custom_call.1} parent=0
    _
  %s6 = ssub.s32 1, %s4
  %s7 = scalar_select 0, %s6, %s4
  $region1: #{tpu_custom_call.1} parent=0
    #allocation2 [shape = 'u8[32768]{0}', space=vmem, size = 0x8000, scoped, tag = 'input window, operand 0']
    #allocation3 [shape = 's32[2]{0}', space=sflag, size = 0x8, scoped, tag = 'scoped memory for tpu_custom_call.1']
    #allocation4 [shape = 's32[2]{0}', space=sflag, size = 0x8, scoped, tag = 'scoped memory for tpu_custom_call.1']
    #allocation5 [shape = 'u8[8192]{0}', space=vmem, size = 0x2000, scoped, tag = 'input window, operand 1, single buffered']
    #allocation6 [shape = 's32[1]{0}', space=sflag, size = 0x4, scoped, tag = 'scoped memory for tpu_custom_call.1']
    #allocation7 [shape = 'u8[4096]{0}', space=vmem, size = 0x1000, scoped, tag = 'input window, operand 2']
    #allocation8 [shape = 'u8[16384]{0}', space=vmem, size = 0x4000, scoped, tag = 'output window, operand 0']
    %8 = vsyncpa [#allocation3], 0
    %s9 = scalar_lea.sflag [#allocation3], 1
    %10 = vsyncpa %s9, 0
    %11 = vsyncpa [#allocation6], 0
    %12 = vsyncpa [#allocation4], 0
    %s13 = scalar_lea.sflag [#allocation4], 1
    %14 = vsyncpa %s13, 0
    loop: start=0, step=1, limit=4
    $region2: #{tpu_custom_call.1} parent=1 // loop_pre_header
      _
    $region3: #{tpu_custom_call.1} parent=1 // loop_header
      %s16 = sphi 0, %s20
      %p17 = scmp.ge.s32.totalorder %s16, 4
      %s26 = sphi 0, %s28
      %s29 = sphi 0, %s26
      %s30 = sphi 0, %s29
      %s46 = sphi 0, %s30
      %s50 = sphi 0, %s50
      %s52 = sphi 0, %s50
      %s53 = sphi 0, %s52
      %s67 = sphi 0, %s53
      %s73 = sphi 0, %s75
      %s76 = sphi 0, %s73
      %s77 = sphi 0, %s76
      %s93 = sphi 0, %s77
      %s99 = sphi 0, %s101
      %s102 = sphi 0, %s99
      %s103 = sphi 0, %s102
      %s119 = sphi 0, %s103
    $region4: #{tpu_custom_call.1} parent=1 // loop_header_branch
      %19 = sbr.rel (%p17) target = $region8
    $region5: #{tpu_custom_call.1} parent=1 // loop_body
      %s21 = ssub.s32 %s16, 1
      %s22 = ssub.s32 %s16, 2
      %s23 = sadd.s32 %s16, 1
      %s24 = ssub.s32 %s16, %s23
      %p25 = scmp.eq.s32.totalorder %s24, 0
      %s27 = sadd.s32 %s26, 1
      %s28 = scalar_select %p25, %s26, %s27
      %p31 = pneg %p25
      %p32 = scmp.eq.s32.totalorder %s16, 1
      %p33 = por %p31, %p32
      %p34 = scmp.ne.s32.totalorder %s26, %s29
      %p35 = scmp.eq.s32.totalorder %s16, 0
      %p36 = por %p34, %p35
      %p37 = scmp.ne.s32.totalorder %s26, %s29
      %p38 = scmp.eq.s32.totalorder %s21, 1
      %p39 = por %p37, %p38
      %p40 = scmp.ne.s32.totalorder %s29, %s30
      %p41 = scmp.eq.s32.totalorder %s21, 0
      %p42 = por %p40, %p41
      %p43 = scmp.ne.s32.totalorder %s29, %s30
      %p44 = scmp.eq.s32.totalorder %s22, 1
      %p45 = por %p43, %p44
      %p47 = scmp.ne.s32.totalorder %s30, %s46
      %p48 = scmp.eq.s32.totalorder %s22, 0
      %p49 = por %p47, %p48
      %s51 = sadd.s32 %s50, 1
      %p54 = scmp.eq.s32.totalorder %s16, 1
      %p55 = scmp.ne.s32.totalorder %s50, %s52
      %p56 = scmp.eq.s32.totalorder %s16, 0
      %p57 = por %p55, %p56
      %p58 = scmp.ne.s32.totalorder %s50, %s52
      %p59 = scmp.eq.s32.totalorder %s21, 1
      %p60 = por %p58, %p59
      %p61 = scmp.ne.s32.totalorder %s52, %s53
      %p62 = scmp.eq.s32.totalorder %s21, 0
      %p63 = por %p61, %p62
      %p64 = scmp.ne.s32.totalorder %s52, %s53
      %p65 = scmp.eq.s32.totalorder %s22, 1
      %p66 = por %p64, %p65
      %p68 = scmp.ne.s32.totalorder %s53, %s67
      %p69 = scmp.eq.s32.totalorder %s22, 0
      %p70 = por %p68, %p69
      %s71 = ssub.s32 %s16, %s23
      %p72 = scmp.eq.s32.totalorder %s71, 0
      %s74 = sadd.s32 %s73, 1
      %s75 = scalar_select %p72, %s73, %s74
      %p78 = pneg %p72
      %p79 = scmp.eq.s32.totalorder %s16, 1
      %p80 = por %p78, %p79
      %p81 = scmp.ne.s32.totalorder %s73, %s76
      %p82 = scmp.eq.s32.totalorder %s16, 0
      %p83 = por %p81, %p82
      %p84 = scmp.ne.s32.totalorder %s73, %s76
      %p85 = scmp.eq.s32.totalorder %s21, 1
      %p86 = por %p84, %p85
      %p87 = scmp.ne.s32.totalorder %s76, %s77
      %p88 = scmp.eq.s32.totalorder %s21, 0
      %p89 = por %p87, %p88
      %p90 = scmp.ne.s32.totalorder %s76, %s77
      %p91 = scmp.eq.s32.totalorder %s22, 1
      %p92 = por %p90, %p91
      %p94 = scmp.ne.s32.totalorder %s77, %s93
      %p95 = scmp.eq.s32.totalorder %s22, 0
      %p96 = por %p94, %p95
      %s97 = ssub.s32 %s16, %s23
      %p98 = scmp.eq.s32.totalorder %s97, 0
      %s100 = sadd.s32 %s99, 1
      %s101 = scalar_select %p98, %s99, %s100
      %p104 = pneg %p98
      %p105 = scmp.eq.s32.totalorder %s16, 1
      %p106 = por %p104, %p105
      %p107 = scmp.ne.s32.totalorder %s99, %s102
      %p108 = scmp.eq.s32.totalorder %s16, 0
      %p109 = por %p107, %p108
      %p110 = scmp.ne.s32.totalorder %s99, %s102
      %p111 = scmp.eq.s32.totalorder %s21, 1
      %p112 = por %p110, %p111
      %p113 = scmp.ne.s32.totalorder %s102, %s103
      %p114 = scmp.eq.s32.totalorder %s21, 0
      %p115 = por %p113, %p114
      %p116 = scmp.ne.s32.totalorder %s102, %s103
      %p117 = scmp.eq.s32.totalorder %s22, 1
      %p118 = por %p116, %p117
      %p120 = scmp.ne.s32.totalorder %s103, %s119
      %p121 = scmp.eq.s32.totalorder %s22, 0
      %p122 = por %p120, %p121
      %p123 = scmp.le.s32.totalorder 1, %s16
      %p124 = scmp.lt.s32.totalorder %s16, 3
      %p125 = pnand %p123, %p124
      %p126 = pneg %p125
      // Predicated region
      $region9: #{tpu_custom_call.1} parent=5 // pred_check
        _
      $region10: #{tpu_custom_call.1} parent=5 // pred_check_branch
        %128 = sbr.rel (%p125) target = $region12
      $region11: #{tpu_custom_call.1} parent=5 // pred_region
        %s129 = ssub.s32 %s16, 1
        // Predicated region
        $region13: #{tpu_custom_call.1} parent=11 // pred_check
          %p130 = pneg %p63
        $region14: #{tpu_custom_call.1} parent=11 // pred_check_branch
          %132 = sbr.rel (%p130) target = $region16
        $region15: #{tpu_custom_call.1} parent=11 // pred_region
          %134 = vsyncadd [#allocation6], 0
          %s135 = sshll.u32 %s1, 4
          %s136 = int_to_ptr.hbm [resolvable:$true] %s135
          %s137 = sshll.u32 [#allocation5], 4
          %s138 = int_to_ptr.vmem [resolvable:$true] %s137
          %143 = dma.hbm_to_vmem [thread:$0]  %s136, 256, %s138, [#allocation6], 128, 128, 8
        $region16: #{tpu_custom_call.1} parent=11 // pred_fallthru
          _
      $region12: #{tpu_custom_call.1} parent=5 // pred_fallthru
        _
      %p144 = scmp.lt.s32.totalorder %s16, 2
      // Predicated region
      $region17: #{tpu_custom_call.1} parent=5 // pred_check
        %p145 = pneg %p144
      $region18: #{tpu_custom_call.1} parent=5 // pred_check_branch
        %147 = sbr.rel (%p145) target = $region20
      $region19: #{tpu_custom_call.1} parent=5 // pred_region
        // Predicated region
        $region21: #{tpu_custom_call.1} parent=19 // pred_check
          %p148 = pneg %p36
        $region22: #{tpu_custom_call.1} parent=19 // pred_check_branch
          %150 = sbr.rel (%p148) target = $region24
        $region23: #{tpu_custom_call.1} parent=19 // pred_region
          %s151 = sand.u32 %s16, 1
          %s152 = scalar_lea.sflag [#allocation3], %s151
          %s153 = sand.u32 %s26, 1
          %s154 = smul.addr %s153, 32
          %s155 = scalar_lea.vmem [#allocation2], %s154
          %157 = vsyncadd %s152, 0
          %s158 = smul.addr %s16, 4
          %s159 = smul.addr %s158, 8
          %s160 = scalar_lea.hbm %s0, %s159
          %s161 = sshll.u32 %s160, 4
          %s162 = int_to_ptr.hbm [resolvable:$true] %s161
          %s163 = sshll.u32 %s155, 4
          %s164 = int_to_ptr.vmem [resolvable:$true] %s163
          %169 = dma.hbm_to_vmem [thread:$0]  %s162, 512, %s164, %s152, 128, 128, 8
        $region24: #{tpu_custom_call.1} parent=19 // pred_fallthru
          _
        // Predicated region
        $region25: #{tpu_custom_call.1} parent=19 // pred_check
          %p170 = pneg %p83
        $region26: #{tpu_custom_call.1} parent=19 // pred_check_branch
          %172 = sbr.rel (%p170) target = $region28
        $region27: #{tpu_custom_call.1} parent=19 // pred_region
          %s173 = sand.u32 %s16, 1
          %s174 = scalar_lea.sflag [#allocation3], %s173
          %s175 = sand.u32 %s73, 1
          %s176 = smul.addr %s175, 4
          %s177 = scalar_lea.vmem [#allocation7], %s176
          %179 = vsyncadd %s174, 0
          %s180 = smul.addr %s16, 2
          %s181 = smul.addr %s180, 2
          %s182 = scalar_lea.hbm %s2, %s181
          %s183 = sshll.u32 %s182, 4
          %s184 = int_to_ptr.hbm [resolvable:$true] %s183
          %s185 = sshll.u32 %s177, 4
          %s186 = int_to_ptr.vmem [resolvable:$true] %s185
          %191 = dma.hbm_to_vmem [thread:$0]  %s184, 64, %s186, %s174, 32, 32, 2
        $region28: #{tpu_custom_call.1} parent=19 // pred_fallthru
          _
      $region20: #{tpu_custom_call.1} parent=5 // pred_fallthru
        _
      %p192 = scmp.le.s32.totalorder 1, %s16
      %p193 = scmp.lt.s32.totalorder %s16, 3
      %p194 = pnand %p192, %p193
      %p195 = pneg %p194
      // Predicated region
      $region29: #{tpu_custom_call.1} parent=5 // pred_check
        _
      $region30: #{tpu_custom_call.1} parent=5 // pred_check_branch
        %197 = sbr.rel (%p194) target = $region32
      $region31: #{tpu_custom_call.1} parent=5 // pred_region
        %s198 = ssub.s32 %s16, 1
        %s199 = sand.u32 %s21, 1
        %s200 = scalar_lea.sflag [#allocation3], %s199
        %s201 = sand.u32 %s29, 1
        %s202 = smul.addr %s201, 32
        %s203 = scalar_lea.vmem [#allocation2], %s202
        // Predicated region
        $region33: #{tpu_custom_call.1} parent=31 // pred_check
          %p204 = pneg %p42
        $region34: #{tpu_custom_call.1} parent=31 // pred_check_branch
          %206 = sbr.rel (%p204) target = $region36
        $region35: #{tpu_custom_call.1} parent=31 // pred_region
          %208 = dma.done %s200, 512
        $region36: #{tpu_custom_call.1} parent=31 // pred_fallthru
          _
        // Predicated region
        $region37: #{tpu_custom_call.1} parent=31 // pred_check
          %p209 = pneg %p63
        $region38: #{tpu_custom_call.1} parent=31 // pred_check_branch
          %211 = sbr.rel (%p209) target = $region40
        $region39: #{tpu_custom_call.1} parent=31 // pred_region
          %213 = dma.done [#allocation6], 256
        $region40: #{tpu_custom_call.1} parent=31 // pred_fallthru
          _
        %s214 = sand.u32 %s21, 1
        %s215 = scalar_lea.sflag [#allocation3], %s214
        %s216 = sand.u32 %s76, 1
        %s217 = smul.addr %s216, 4
        %s218 = scalar_lea.vmem [#allocation7], %s217
        // Predicated region
        $region41: #{tpu_custom_call.1} parent=31 // pred_check
          %p219 = pneg %p89
        $region42: #{tpu_custom_call.1} parent=31 // pred_check_branch
          %221 = sbr.rel (%p219) target = $region44
        $region43: #{tpu_custom_call.1} parent=31 // pred_region
          %223 = dma.done %s215, 64
        $region44: #{tpu_custom_call.1} parent=31 // pred_fallthru
          _
        %s224 = sand.u32 %s21, 1
        %s225 = scalar_lea.sflag [#allocation3], %s224
        %s226 = sand.u32 %s29, 1
        %s227 = smul.addr %s226, 32
        %s228 = scalar_lea.vmem [#allocation2], %s227
        %p229 = pneg %p42
        %p230 = pneg %p39
        %p231 = pneg %p63
        %p232 = pneg %p60
        %s233 = sand.u32 %s21, 1
        %s234 = scalar_lea.sflag [#allocation3], %s233
        %s235 = sand.u32 %s76, 1
        %s236 = smul.addr %s235, 4
        %s237 = scalar_lea.vmem [#allocation7], %s236
        %p238 = pneg %p89
        %p239 = pneg %p86
        %p240 = pneg %p115
        %p241 = pneg %p112
        %s242 = sand.u32 %s102, 1
        %s243 = scalar_lea.sflag [#allocation4], %s242
        %s244 = sand.u32 %s102, 1
        %s245 = smul.addr %s244, 16
        %s246 = scalar_lea.vmem [#allocation8], %s245
        %v247 = vld [vmem:[%s203] sm:$0xff]
        %v248 = vld [vmem:[%s203 + $0x8] sm:$0xff]
        %v249 = vld [vmem:[%s203 + $0x10] sm:$0xff]
        %v250 = vld [vmem:[%s203 + $0x18] sm:$0xff]
        %v251 = vld [vmem:[#allocation5] sm:$0xff]
        %v252 = vld [vmem:[#allocation5 + $0x8] sm:$0xff]
        %vm253 = vcmask 261120
        %v255 = vsel %vm253, %v251, 0
        %v258 = vsel %vm253, %v252, 0
        %260 = vmatpush.msra.mxu0 0.0
        %261 = vmatpush.msra.mxu0 0.0
        %262 = vmatpush.msra.mxu0 0.0
        %263 = vmatpush.msra.mxu0 0.0
        %264 = vmatpush.msra.mxu0 0.0
        %265 = vmatpush.msra.mxu0 0.0
        %266 = vmatpush.msra.mxu0 0.0
        %267 = vmatpush.msra.mxu0 0.0
        %268 = vmatpush.msra.mxu0 0.0
        %269 = vmatpush.msra.mxu0 0.0
        %270 = vmatpush.msra.mxu0 0.0
        %271 = vmatpush.msra.mxu0 0.0
        %272 = vmatpush.msra.mxu0 %v250
        %273 = vmatpush.msra.mxu0 %v249
        %274 = vmatpush.msra.mxu0 %v248
        %275 = vmatpush.msra.mxu0 %v247
        %276 = vmatmul.f32.gmra.mxu0 %v255
        %v277 = vpop.f32.mrf.mxu0
        %v278 = vadd.f32 0.0, %v277
        %279 = vmatmul.f32.gmra.mxu0 %v258
        %v280 = vpop.f32.mrf.mxu0
        %v281 = vadd.f32 0.0, %v280
        %282 = vdwg.mxu0
        %v283 = vlaneseq
        %v284 = vand.u32 %v283, 127
        %vm285 = vcmp.lt.s32.totalorder %v284, 8
        %v286 = vsel %vm285, %v278, -inf
        %v287 = vsel %vm285, %v281, -inf
        %v288 = vld [vmem:[%s218] sm:$0x3]
        %v289 = vld [vmem:[%s218 + $0x2] sm:$0x3]
        %v290 = vunpack.c.0.s8 %v288
        %v291 = vunpack.c.0.s8 %v289
        %v292 = vcvt.s32.f32 %v290
        %v293 = vcvt.s32.f32 %v291
        %294 = vmax.xlane.f32.xlu0 %v286
        %v295 = vpop.xlane.xlu0 %294
        %296 = vmax.xlane.f32.xlu0 %v287
        %v297 = vpop.xlane.xlu0 %296
        %v298 = vsub.f32 %v286, %v295
        %v299 = vsub.f32 %v287, %v297
        %v300 = vmul.f32 %v298, 1.442695
        %v301 = vpow.pop %v300
        %v302 = vmul.f32 %v299, 1.442695
        %v303 = vpow.pop %v302
        %vm304 = vcmp.gt.f32.partialorder %v292, 0.5
        %vm305 = vcmp.gt.f32.partialorder %v293, 0.5
        %v306 = vsel %vm304, 1.0, 1e-10
        %v307 = vsel %vm305, 1.0, 1e-10
        %v308 = vmul.f32 %v301, %v306
        %v309 = vmul.f32 %v303, %v307
        %310 = vadd.xlane.f32.xlu0 %v308
        %v311 = vpop.xlane.xlu0 %310
        %312 = vadd.xlane.f32.xlu0 %v309
        %v313 = vpop.xlane.xlu0 %312
        %v314 = vrcp.pop %v311
        %v315 = vrcp.pop %v313
        %v316 = vmul.f32 %v311, %v314
        %v317 = vmul.f32 %v313, %v315
        %v318 = vsub.f32 2.0, %v316
        %v319 = vsub.f32 2.0, %v317
        %v320 = vmul.f32 %v314, %v318
        %v321 = vmul.f32 %v315, %v319
        %v322 = vmul.f32 %v308, %v320
        %v323 = vmul.f32 %v309, %v321
        %v324 = vmul.f32 %v322, %v292
        %v325 = vmul.f32 %v323, %v293
        %326 = vst [vmem:[%s246] sm:$0xff] %v324
        %327 = vst [vmem:[%s246 + $0x8] sm:$0xff] %v325
        %s328 = sand.u32 %s102, 1
        %s329 = scalar_lea.sflag [#allocation4], %s328
        %s330 = sand.u32 %s102, 1
        %s331 = smul.addr %s330, 16
        %s332 = scalar_lea.vmem [#allocation8], %s331
        // Predicated region
        $region45: #{tpu_custom_call.1} parent=31 // pred_check
          %p333 = pneg %p112
        $region46: #{tpu_custom_call.1} parent=31 // pred_check_branch
          %335 = sbr.rel (%p333) target = $region48
        $region47: #{tpu_custom_call.1} parent=31 // pred_region
          %337 = vsyncadd %s329, 0
          %s338 = smul.addr %s21, 2
          %s339 = smul.addr %s338, 8
          %s340 = scalar_lea.hbm %s3, %s339
          %s341 = sshll.u32 %s332, 4
          %s342 = int_to_ptr.vmem [resolvable:$true] %s341
          %s343 = sshll.u32 %s340, 4
          %s344 = int_to_ptr.hbm [resolvable:$true] %s343
          %349 = dma.vmem_to_hbm [thread:$0]  %s342, 256, %s344, %s329, 128, 128, 8
        $region48: #{tpu_custom_call.1} parent=31 // pred_fallthru
          _
      $region32: #{tpu_custom_call.1} parent=5 // pred_fallthru
        _
      %p350 = scmp.le.s32.totalorder 2, %s16
      // Predicated region
      $region49: #{tpu_custom_call.1} parent=5 // pred_check
        %p351 = pneg %p350
      $region50: #{tpu_custom_call.1} parent=5 // pred_check_branch
        %353 = sbr.rel (%p351) target = $region52
      $region51: #{tpu_custom_call.1} parent=5 // pred_region
        %s354 = ssub.s32 %s16, 2
        // Predicated region
        $region53: #{tpu_custom_call.1} parent=51 // pred_check
          %p355 = pneg %p118
        $region54: #{tpu_custom_call.1} parent=51 // pred_check_branch
          %357 = sbr.rel (%p355) target = $region56
        $region55: #{tpu_custom_call.1} parent=51 // pred_region
          %s358 = sand.u32 %s103, 1
          %s359 = scalar_lea.sflag [#allocation4], %s358
          %s360 = sand.u32 %s103, 1
          %s361 = smul.addr %s360, 16
          %s362 = scalar_lea.vmem [#allocation8], %s361
          %364 = dma.done %s359, 256
        $region56: #{tpu_custom_call.1} parent=51 // pred_fallthru
          _
      $region52: #{tpu_custom_call.1} parent=5 // pred_fallthru
        _
    $region6: #{tpu_custom_call.1} parent=1 // loop_footer
      %s20 = sadd.s32 1, %s16
    $region7: #{tpu_custom_call.1} parent=1 // loop_footer_branch
      %15 = sbr.rel target = $region3
    $region8: #{tpu_custom_call.1} parent=1 // loop_exit
      _
    %365 = vsyncpa [#allocation3], 1
    %s366 = scalar_lea.sflag [#allocation3], 1
    %367 = vsyncpa %s366, 1
    %368 = vsyncpa [#allocation6], 1
    %369 = vsyncpa [#allocation4], 1
    %s370 = scalar_lea.sflag [#allocation4], 1
    %371 = vsyncpa %s370, 1

</llo_original>
